<compile_context>
chip_gen: v7x
topology: tpu7x:2x2x1
jax: 0.10.0
libtpu: 0.0.40
codegen_flags: <defaults>
</compile_context>

<pallas_src>
import math

import jax
import jax.numpy as jnp
from jax.experimental import pallas as pl
from jax.experimental.pallas import tpu as pltpu


def _round_up(x, m):
    return ((x + m - 1) // m) * m


def _sublane_multiple(dtype):
    # 8 sublanes of 32-bit; sub-32-bit dtypes pack along sublanes.
    return max(8, 32 // jnp.dtype(dtype).itemsize)


def _lane_fold_factor(D):
    """Smallest k such that (k * D) % 128 == 0 (lane-dense stores)."""
    return 128 // math.gcd(D, 128)


def _pick_rows(total_rows, row_bytes, sub, target_bytes):
    """Rows per block from a VMEM byte budget (block ~= target_bytes)."""
    rows = max(sub, (target_bytes // max(row_bytes, 1)) // sub * sub)
    if rows >= total_rows:
        return total_rows          # full-extent block: always layout-legal
    return rows                    # multiple of `sub`; tail block masked


# ----------------------------------------------------------------------------
# The single streaming kernel: out = x * scale (broadcast), native dtype.
# Works for both the 2-D non-gated path and the 3-D per-batch gated path.
# ----------------------------------------------------------------------------
def _ia3_scale_kernel(x_ref, s_ref, o_ref):
    o_ref[...] = (x_ref[...] * s_ref[...]).astype(o_ref.dtype)


# ----------------------------------------------------------------------------
# Non-gated path:  out = hidden * lora_B * alpha
# ----------------------------------------------------------------------------
def ia3_forward(hidden_states, lora_B, alpha, *, target_block_bytes=2 * 1024 * 1024):
    B, S, D = hidden_states.shape
    dtype = hidden_states.dtype
    M = B * S
    x2d = hidden_states.reshape(M, D)

    # Fold alpha into the per-feature scale once (O(D), outside the kernel).
    scale = lora_B.reshape(-1).astype(jnp.float32) * jnp.float32(alpha)

    # Lane-dense output: fold k rows into the lane axis when D % 128 != 0
    # (free row-major reshape; scale tiled k times).
    k = _lane_fold_factor(D)
    if k > 1 and M % k == 0:
        Mf, Df = M // k, k * D
        x2d = x2d.reshape(Mf, Df)
        scale = jnp.tile(scale, (k,))
    else:
        Mf, Df = M, D
    scale2d = scale.reshape(1, Df).astype(dtype)   # native-dtype multiply

    sub = _sublane_multiple(dtype)
    row_bytes = Df * jnp.dtype(dtype).itemsize
    tm = _pick_rows(Mf, row_bytes, sub, target_block_bytes)
    grid = (pl.cdiv(Mf, tm),)      # tail block handled by Pallas masking

    out2d = pl.pallas_call(
        _ia3_scale_kernel,
        out_shape=jax.ShapeDtypeStruct((Mf, Df), dtype),
        grid_spec=pltpu.PrefetchScalarGridSpec(
            num_scalar_prefetch=0,
            grid=grid,
            in_specs=[
                pl.BlockSpec((tm, Df), lambda i: (i, 0)),
                pl.BlockSpec((1, Df), lambda i: (0, 0)),
            ],
            out_specs=pl.BlockSpec((tm, Df), lambda i: (i, 0)),
        ),
        compiler_params=pltpu.CompilerParams(
            dimension_semantics=("parallel",)),
    )(x2d, scale2d)
    return out2d.reshape(B, S, D), None


# ----------------------------------------------------------------------------
# Gated path (two-pass):
#   pass 1 (tiny, XLA): gate = mean_S(sigmoid(layer_input @ gate_w.T + gate_b))
#   pass 2 (Pallas):    out  = hidden * (lora_B * gate[b])   -- streaming scale
# ----------------------------------------------------------------------------
def _compute_gate(layer_input, gate_w, gate_b):
    logits = jnp.einsum('bsd,hd->bsh', layer_input.astype(jnp.float32),
                        gate_w.astype(jnp.float32)) + gate_b.astype(jnp.float32)
    return jnp.mean(jax.nn.sigmoid(logits), axis=1)            # (B, heads)


def ia3_forward_gated(hidden_states, layer_input, lora_B, gate_w, gate_b,
                      *, target_block_bytes=2 * 1024 * 1024):
    B, S, D = hidden_states.shape
    heads = gate_w.shape[0]
    assert heads == 1, "IA3 gated broadcast is only well-defined for gating_heads == 1"
    dtype = hidden_states.dtype

    # Pass 1: per-batch gate.  Trivial GEMV + mean -> plain XLA (per review);
    # the O(B*S*D) elementwise traffic is what the Pallas kernel streams.
    gate_mean = _compute_gate(layer_input, gate_w, gate_b)      # (B, 1)

    # Fold the per-batch gate scalar into the per-feature scale once: (B, D).
    comb = lora_B.reshape(1, D).astype(jnp.float32) * gate_mean[:, 0:1]

    # Lane-dense folding along S (free reshape within each batch).
    k = _lane_fold_factor(D)
    if k > 1 and S % k == 0:
        Sf, Df = S // k, k * D
        x3d = hidden_states.reshape(B, Sf, Df)
        comb = jnp.tile(comb, (1, k))
    else:
        Sf, Df = S, D
        x3d = hidden_states
    comb3d = comb.reshape(B, 1, Df).astype(dtype)

    sub = _sublane_multiple(dtype)
    row_bytes = Df * jnp.dtype(dtype).itemsize
    ts = _pick_rows(Sf, row_bytes, sub, target_block_bytes)
    grid = (B, pl.cdiv(Sf, ts))      # (batch, s_tile): bounded VMEM blocks

    out3d = pl.pallas_call(
        _ia3_scale_kernel,
        out_shape=jax.ShapeDtypeStruct((B, Sf, Df), dtype),
        grid_spec=pltpu.PrefetchScalarGridSpec(
            num_scalar_prefetch=0,
            grid=grid,
            in_specs=[
                pl.BlockSpec((1, ts, Df), lambda b, s: (b, s, 0)),
                pl.BlockSpec((1, 1, Df), lambda b, s: (b, 0, 0)),
            ],
            out_specs=pl.BlockSpec((1, ts, Df), lambda b, s: (b, s, 0)),
        ),
        compiler_params=pltpu.CompilerParams(
            dimension_semantics=("parallel", "parallel")),
    )(x3d, comb3d)

    return out3d.reshape(B, S, D), gate_mean[:, :, None]        # (B, heads, 1)


# ----------------------------------------------------------------------------
# Full IA3.forward dispatch (handles hidden_states is None).
# ----------------------------------------------------------------------------
def ia3_apply(hidden_states, layer_input, lora_B, alpha, *, gate_w=None, gate_b=None):
    D = lora_B.size
    B = layer_input.shape[0]
    if hidden_states is None:
        # torch: hidden_states = scaling_vector (broadcast).  Tiny work -> pure
        # XLA, no kernel launch.  Output dtype follows lora_B like torch.
        sv = jnp.broadcast_to(lora_B.reshape(1, 1, D), (B, 1, D))
        if gate_w is not None:
            gate = _compute_gate(layer_input, gate_w, gate_b)[:, :, None]
            return sv * gate.astype(sv.dtype), gate
        return sv * jnp.asarray(alpha, sv.dtype), None
    if gate_w is not None:
        return ia3_forward_gated(hidden_states, layer_input, lora_B, gate_w, gate_b)
    return ia3_forward(hidden_states, lora_B, alpha)


# ----------------------------------------------------------------------------
# Pure-JAX references.
# ----------------------------------------------------------------------------
def _ref_plain(x, lora_B, alpha):
    return x.astype(jnp.float32) * lora_B.reshape(1, 1, -1).astype(jnp.float32) * alpha


def _ref_gated(x, li, lora_B, gw, gb):
    h = x.astype(jnp.float32) * lora_B.reshape(1, 1, -1).astype(jnp.float32)
    gate = jax.nn.sigmoid(li.astype(jnp.float32) @ gw.astype(jnp.float32).T + gb)
    gate = jnp.mean(gate, axis=1)[:, :, None]
    return h * gate, gate


if __name__ == "__main__":
    # Small shapes consistent with the module: hidden = 32, r = 1, heads = 1.
    B, S, D = 2, 8, 32
    heads = 1
    alpha = 2.0   # self.scaling = lora_alpha

    key = jax.random.PRNGKey(0)
    k1, k2, k3, k4 = jax.random.split(key, 4)

    # 'bert' init: normal std=0.02; gate bias zeros.
    lora_B = (1.0 + 0.02 * jax.random.normal(k1, (1, D))).astype(jnp.float32)
    gate_w = (0.02 * jax.random.normal(k2, (heads, D))).astype(jnp.float32)
    gate_b = jnp.zeros((heads,), jnp.float32)

    hidden_states = jax.random.normal(k3, (B, S, D), jnp.float32)
    layer_input = jax.random.normal(k4, (B, S, D), jnp.float32)

    # use_gating = False branch
    out, gate = ia3_apply(hidden_states, layer_input, lora_B, alpha)
    out = jax.block_until_ready(out)
    ref = _ref_plain(hidden_states, lora_B, alpha)
    assert gate is None
    assert jnp.allclose(out, ref, atol=1e-5, rtol=1e-5), "no-gating mismatch"

    # Masked-tail path: force tm < M with a small byte budget (M=10 not a
    # multiple of tm=8) -> Pallas masks the tail block, no pad / slice.
    hs_odd = jax.random.normal(k3, (B, 5, D), jnp.float32)
    out_odd, _ = ia3_forward(hs_odd, lora_B, alpha, target_block_bytes=1024)
    out_odd = jax.block_until_ready(out_odd)
    assert jnp.allclose(out_odd, _ref_plain(hs_odd, lora_B, alpha),
                        atol=1e-5, rtol=1e-5), "tail mismatch"

    # hidden_states is None branch (pure XLA, no kernel launch)
    out_none, _ = ia3_apply(None, layer_input, lora_B, alpha)
    out_none = jax.block_until_ready(out_none)
    ref_none = jnp.broadcast_to(lora_B.reshape(1, 1, D), (B, 1, D)) * alpha
    assert jnp.allclose(out_none, ref_none, atol=1e-5, rtol=1e-5), "None-hidden mismatch"

    # use_gating = True branch (two-pass: XLA gate + streaming Pallas scale)
    out_g, gate_g = ia3_apply(hidden_states, layer_input, lora_B, alpha,
                              gate_w=gate_w, gate_b=gate_b)
    out_g = jax.block_until_ready(out_g)
    ref_g, ref_gate = _ref_gated(hidden_states, layer_input, lora_B, gate_w, gate_b)
    assert out_g.shape == (B, S, D) and gate_g.shape == (B, heads, 1)
    assert jnp.allclose(out_g, ref_g, atol=1e-5, rtol=1e-5), "gated mismatch"
    assert jnp.allclose(gate_g, ref_gate, atol=1e-6, rtol=1e-6), "gate mismatch"

    # bf16 path: multiply stays in bf16 inside the kernel (native on v6e/v7x).
    hs_bf16 = hidden_states.astype(jnp.bfloat16)
    out_bf, _ = ia3_apply(hs_bf16, layer_input, lora_B, alpha)
    out_bf = jax.block_until_ready(out_bf)
    assert out_bf.dtype == jnp.bfloat16
    assert jnp.allclose(out_bf.astype(jnp.float32),
                        _ref_plain(hs_bf16, lora_B, alpha),
                        atol=5e-2, rtol=5e-2), "bf16 mismatch"

    print("KERNEL_OK")
</pallas_src>

<mosaic_0001>
module attributes {stable_mosaic.version = 11 : i64} {
  func.func @_ia3_scale_kernel(%arg0: i32, %arg1: memref<4x128xf32, #tpu.memory_space<vmem>>, %arg2: memref<1x128xf32, #tpu.memory_space<vmem>>, %arg3: memref<4x128xf32, #tpu.memory_space<vmem>>) attributes {dimension_semantics = [#tpu.dimension_semantics<parallel>], iteration_bounds = array<i64: 1>, scalar_prefetch = 0 : i64, scratch_operands = 0 : i64, tpu.core_type = #tpu.core_type<tc>, window_params = [{transform_indices = @transform_0, window_bounds = array<i64: 4, 128>}, {pipeline_mode = #tpu.pipeline_mode<synchronous>, transform_indices = @transform_1, window_bounds = array<i64: 1, 128>}, {transform_indices = @transform_2, window_bounds = array<i64: 4, 128>}]} {
    %c0 = arith.constant 0 : index
    %c0_0 = arith.constant 0 : index
    %0 = vector.load %arg1[%c0, %c0_0] : memref<4x128xf32, #tpu.memory_space<vmem>>, vector<4x128xf32>
    %c0_1 = arith.constant 0 : index
    %c0_2 = arith.constant 0 : index
    %1 = vector.load %arg2[%c0_1, %c0_2] : memref<1x128xf32, #tpu.memory_space<vmem>>, vector<1x128xf32>
    %2 = vector.broadcast %1 : vector<1x128xf32> to vector<4x128xf32>
    %3 = arith.mulf %0, %2 : vector<4x128xf32>
    %c0_3 = arith.constant 0 : index
    %c0_4 = arith.constant 0 : index
    %4 = vector.load %arg3[%c0_3, %c0_4] : memref<4x128xf32, #tpu.memory_space<vmem>>, vector<4x128xf32>
    tpu.vector_store %arg3[%c0_3, %c0_4], %3 {strides = array<i32>} : memref<4x128xf32, #tpu.memory_space<vmem>>, vector<4x128xf32>,
    return
  }
  func.func @transform_0(%arg0: i32) -> (i32, i32) {
    %c0_i32 = arith.constant 0 : i32
    %c0_i32_0 = arith.constant 0 : i32
    return %arg0, %c0_i32 : i32, i32
  }
  func.func @transform_1(%arg0: i32) -> (i32, i32) {
    %c0_i32 = arith.constant 0 : i32
    %c0_i32_0 = arith.constant 0 : i32
    %c0_i32_1 = arith.constant 0 : i32
    return %c0_i32, %c0_i32_0 : i32, i32
  }
  func.func @transform_2(%arg0: i32) -> (i32, i32) {
    %c0_i32 = arith.constant 0 : i32
    %c0_i32_0 = arith.constant 0 : i32
    return %arg0, %c0_i32 : i32, i32
  }
}

</mosaic_0001>

<llo_original>
// kernel: tpu_custom_call.1
$region0: #{tpu_custom_call.1}
  #allocation0 [shape = 'u32[]', space=smem, size = 0x4, offset = 0x4, fixed_abs, tag = 'smem constant byte address 0x4 - core index']
  #allocation1 [shape = 'u32[144,128]{1,0:T(1,128)}', space=vmem, size = 0x12000, scoped, tag = 'internal scratch']
  %s0 = inlined_call_operand.hbm [shape: f32[4,128], index: 0, kind: input, shape index: {}]
  %s1 = inlined_call_operand.vmem [shape: f32[1,128], index: 1, kind: input, shape index: {}]
  %s2 = inlined_call_operand.hbm [shape: f32[4,128], index: 2, kind: output, shape index: {}]
  %s3 = sld [smem:[#allocation0]]
  $region22: #{tpu_custom_call.1} parent=0
    _
  %s5 = ssub.s32 1, %s3
  %s6 = scalar_select 0, %s5, %s3
  $region1: #{tpu_custom_call.1} parent=0
    #allocation2 [shape = 'u8[2048]{0}', space=vmem, size = 0x800, scoped, tag = 'input window, operand 0, single buffered']
    #allocation3 [shape = 's32[1]{0}', space=sflag, size = 0x4, scoped, tag = 'scoped memory for tpu_custom_call.1']
    #allocation4 [shape = 's32[1]{0}', space=sflag, size = 0x4, scoped, tag = 'scoped memory for tpu_custom_call.1']
    #allocation5 [shape = 'u8[2048]{0}', space=vmem, size = 0x800, scoped, tag = 'output window, operand 0, single buffered']
    %7 = vsyncpa [#allocation3], 0
    %8 = vsyncpa [#allocation4], 0
    // Predicated region
    $region2: #{tpu_custom_call.1} parent=1 // pred_check
      _
    $region3: #{tpu_custom_call.1} parent=1 // pred_check_branch
      %10 = sbr.rel (0) target = $region5
    $region4: #{tpu_custom_call.1} parent=1 // pred_region
      %s12 = ssub.s32 64, 64
      %13 = vsyncadd [#allocation3], %s12
      %s15 = sshll.u32 [#allocation2], 4
      %s16 = int_to_ptr.vmem [resolvable:$true] %s15
      %18 = dma.hbm_to_vmem [thread:$0]  %s0, 64, %s16, [#allocation3]
    $region5: #{tpu_custom_call.1} parent=1 // pred_fallthru
      _
    // Predicated region
    $region6: #{tpu_custom_call.1} parent=1 // pred_check
      _
    $region7: #{tpu_custom_call.1} parent=1 // pred_check_branch
      %20 = sbr.rel (0) target = $region9
    $region8: #{tpu_custom_call.1} parent=1 // pred_region
      _
    $region9: #{tpu_custom_call.1} parent=1 // pred_fallthru
      _
    // Predicated region
    $region10: #{tpu_custom_call.1} parent=1 // pred_check
      _
    $region11: #{tpu_custom_call.1} parent=1 // pred_check_branch
      %22 = sbr.rel (0) target = $region13
    $region12: #{tpu_custom_call.1} parent=1 // pred_region
      %23 = dma.done [#allocation3], 64
    $region13: #{tpu_custom_call.1} parent=1 // pred_fallthru
      _
    %v24 = vld [vmem:[#allocation2] sm:$0xf]
    %v25 = vld [vmem:[%s1] sm:$0x1]
    %v27 = vlaneseq
    %v28 = vshrl.u32 %v27, 7
    %v29 = vsub.s32 0, %v28
    %v30 = vrot.slane %v25, %v29
    %v32 = vmul.f32 %v24, %v30
    %33 = vst [vmem:[#allocation5] sm:$0xf] %v32
    // Predicated region
    $region14: #{tpu_custom_call.1} parent=1 // pred_check
      _
    $region15: #{tpu_custom_call.1} parent=1 // pred_check_branch
      %35 = sbr.rel (0) target = $region17
    $region16: #{tpu_custom_call.1} parent=1 // pred_region
      %s37 = ssub.s32 64, 64
      %38 = vsyncadd [#allocation4], %s37
      %s40 = sshll.u32 [#allocation5], 4
      %s41 = int_to_ptr.vmem [resolvable:$true] %s40
      %43 = dma.vmem_to_hbm [thread:$0]  %s41, 64, %s2, [#allocation4]
    $region17: #{tpu_custom_call.1} parent=1 // pred_fallthru
      _
    // Predicated region
    $region18: #{tpu_custom_call.1} parent=1 // pred_check
      _
    $region19: #{tpu_custom_call.1} parent=1 // pred_check_branch
      %45 = sbr.rel (0) target = $region21
    $region20: #{tpu_custom_call.1} parent=1 // pred_region
      %46 = dma.done [#allocation4], 64
    $region21: #{tpu_custom_call.1} parent=1 // pred_fallthru
      _
    %47 = vsyncpa [#allocation3], 1
    %48 = vsyncpa [#allocation4], 1

</llo_original>
